<compile_context>
chip_gen: v5e
topology: v5e:2x2
jax: 0.10.0
libtpu: 0.0.40
codegen_flags: <defaults>
</compile_context>

<pallas_src>
import functools

import jax
import jax.numpy as jnp
from jax.experimental import pallas as pl
from jax.experimental.pallas import tpu as pltpu

LOG_STD_MIN = -20.0
LOG_STD_MAX = 2.0
_MIN_TILE = 16  # bf16 native sublane packing (16, 128)


def policy_kernel(x_ref, w1_ref, b1_ref, w2_ref, b2_ref, wh_ref, bh_ref,
                  lo_ref, hi_ref, out_ref, *, act_dtype):
    # x_ref: (TB, IN) f32; w*: bf16; b1/b2: act_dtype; bh/lo/hi: f32.
    # out_ref: (TB, 2A) f32.
    x = x_ref[...].astype(jnp.bfloat16)  # in-kernel cast rides spare VPU slots

    # linear1 + relu (bf16 MXU; bias/relu in act_dtype)
    h1 = jnp.dot(x, w1_ref[...], preferred_element_type=act_dtype) + b1_ref[...]
    h1 = jnp.maximum(h1, 0.0)

    # linear2 + relu (astype is a no-op when act_dtype is already bf16)
    h2 = jnp.dot(h1.astype(jnp.bfloat16), w2_ref[...],
                 preferred_element_type=act_dtype) + b2_ref[...]
    h2 = jnp.maximum(h2, 0.0)

    # fused heads: [mean | log_std] in one matmul, f32 accumulate + f32 bias
    heads = jnp.dot(h2.astype(jnp.bfloat16), wh_ref[...],
                    preferred_element_type=jnp.float32) + bh_ref[...]

    # per-lane clamp: mean lanes get +-FLT_MAX (no-op), log_std lanes [-20, 2]
    out_ref[...] = jnp.minimum(jnp.maximum(heads, lo_ref[...]),
                               hi_ref[...]).astype(out_ref.dtype)


def _round_up(x, m):
    return ((x + m - 1) // m) * m


@functools.partial(jax.jit, static_argnames=("batch_tile",))
def policy_network_forward(state, packed_params, batch_tile=1024):
    """state: (B, num_inputs) f32.  Returns (mean, log_std), both (B, A) f32."""
    w1, b1, w2, b2, wh, bh, lo, hi = packed_params
    B, num_inputs = state.shape
    two_a = wh.shape[1]
    num_actions = two_a // 2

    assert batch_tile % _MIN_TILE == 0, "batch_tile must be a multiple of 16"

    # Clamp the tile so small batches aren't over-padded.
    bt = max(_MIN_TILE, min(batch_tile, _round_up(B, _MIN_TILE)))
    # If one tile covers the whole batch but B is big enough, split into >=2
    # grid steps so both v7x TensorCores get work (free on v5e/v6e).
    if pl.cdiv(B, bt) < 2 and B >= 2 * _MIN_TILE:
        bt = _round_up(pl.cdiv(B, 2), _MIN_TILE)

    bp = pl.cdiv(B, bt) * bt
    x = state
    if bp != B:
        x = jnp.pad(x, ((0, bp - B), (0, 0)))  # minimal pad; rows sliced off

    def bcast_spec(arr):
        return pl.BlockSpec(arr.shape, lambda i: (0, 0))

    cp_kwargs = dict(dimension_semantics=("parallel",))
    if bt >= 2048:
        # v5e scoped-VMEM default is 16 MiB; give headroom for big tiles.
        cp_kwargs["vmem_limit_bytes"] = 64 << 20

    kernel = functools.partial(policy_kernel, act_dtype=b1.dtype)

    fused = pl.pallas_call(
        kernel,
        out_shape=jax.ShapeDtypeStruct((bp, two_a), jnp.float32),
        grid=(bp // bt,),
        in_specs=[
            pl.BlockSpec((bt, num_inputs), lambda i: (i, 0)),
            bcast_spec(w1), bcast_spec(b1),
            bcast_spec(w2), bcast_spec(b2),
            bcast_spec(wh), bcast_spec(bh),
            bcast_spec(lo), bcast_spec(hi),
        ],
        out_specs=pl.BlockSpec((bt, two_a), lambda i: (i, 0)),
        compiler_params=pltpu.CompilerParams(**cp_kwargs),
    )(x, w1, b1, w2, b2, wh, bh, lo, hi)

    mean = fused[:B, :num_actions]
    log_std = fused[:B, num_actions:]
    return mean, log_std


def init_params(key, num_inputs, num_actions, hidden_size=256, init_w=0.003):
    """Raw f32 params mirroring the PyTorch module (weights pre-transposed to
    (in, out) so the kernel computes x @ W + b directly)."""
    ks = jax.random.split(key, 8)

    def uniform(k, shape, bound):
        return jax.random.uniform(k, shape, jnp.float32, -bound, bound)

    b1_bound = 1.0 / jnp.sqrt(num_inputs)
    b2_bound = 1.0 / jnp.sqrt(hidden_size)

    w1 = uniform(ks[0], (num_inputs, hidden_size), b1_bound)
    b1 = uniform(ks[1], (1, hidden_size), b1_bound)
    w2 = uniform(ks[2], (hidden_size, hidden_size), b2_bound)
    b2 = uniform(ks[3], (1, hidden_size), b2_bound)
    wm = uniform(ks[4], (hidden_size, num_actions), init_w)
    bm = uniform(ks[5], (1, num_actions), init_w)
    ws = uniform(ks[6], (hidden_size, num_actions), init_w)
    bs = uniform(ks[7], (1, num_actions), init_w)
    return (w1, b1, w2, b2, wm, bm, ws, bs)


def _default_act_dtype():
    """bf16 activations on v6e/v7x (native bf16 VPU); f32 elsewhere (v5e)."""
    try:
        kind = jax.devices()[0].device_kind.lower()
    except Exception:  # pragma: no cover
        kind = ""
    return jnp.bfloat16 if ("v6" in kind or "v7" in kind) else jnp.float32


def pack_params(raw_params, act_dtype=None):
    """Convert raw f32 params to the fused / bf16 layout the kernel expects."""
    if act_dtype is None:
        act_dtype = _default_act_dtype()
    w1, b1, w2, b2, wm, bm, ws, bs = raw_params
    num_actions = wm.shape[1]
    wh = jnp.concatenate([wm, ws], axis=1)            # (hidden, 2A)
    bh = jnp.concatenate([bm, bs], axis=1)            # (1, 2A)
    big = jnp.finfo(jnp.float32).max
    lo = jnp.concatenate([jnp.full((1, num_actions), -big, jnp.float32),
                          jnp.full((1, num_actions), LOG_STD_MIN, jnp.float32)],
                         axis=1)
    hi = jnp.concatenate([jnp.full((1, num_actions), big, jnp.float32),
                          jnp.full((1, num_actions), LOG_STD_MAX, jnp.float32)],
                         axis=1)
    return (w1.astype(jnp.bfloat16), b1.astype(act_dtype),
            w2.astype(jnp.bfloat16), b2.astype(act_dtype),
            wh.astype(jnp.bfloat16), bh.astype(jnp.float32),
            lo, hi)


def reference_forward(state, raw_params):
    """Pure-JAX f32 reference of the PyTorch forward()."""
    w1, b1, w2, b2, wm, bm, ws, bs = raw_params
    h1 = jnp.maximum(state @ w1 + b1, 0.0)
    h2 = jnp.maximum(h1 @ w2 + b2, 0.0)
    mean = h2 @ wm + bm
    log_std = jnp.clip(h2 @ ws + bs, LOG_STD_MIN, LOG_STD_MAX)
    return mean, log_std


if __name__ == "__main__":
    # Small shapes consistent with the module: (batch, num_inputs) state.
    # B=40 is deliberately not tile-aligned -> exercises the 2-step grid and
    # the minimal-padding path.
    B, NUM_INPUTS, NUM_ACTIONS, HIDDEN = 40, 16, 8, 32

    key = jax.random.PRNGKey(0)
    k_params, k_state = jax.random.split(key)

    raw_params = init_params(k_params, NUM_INPUTS, NUM_ACTIONS,
                             hidden_size=HIDDEN)
    packed_params = pack_params(raw_params)
    state = jax.random.normal(k_state, (B, NUM_INPUTS), jnp.float32)

    mean, log_std = policy_network_forward(state, packed_params)
    jax.block_until_ready((mean, log_std))

    ref_mean, ref_log_std = reference_forward(state, raw_params)
    assert mean.shape == (B, NUM_ACTIONS) and log_std.shape == (B, NUM_ACTIONS)
    # bf16 matmuls (and bf16 activations on v6e/v7x) -> relaxed tolerances.
    assert jnp.allclose(mean, ref_mean, atol=3e-2, rtol=3e-2)
    assert jnp.allclose(log_std, ref_log_std, atol=3e-2, rtol=3e-2)

    print("KERNEL_OK")
</pallas_src>

<mosaic_0001>
module attributes {stable_mosaic.version = 11 : i64} {
  func.func @policy_kernel(%arg0: i32, %arg1: memref<32x16xf32, #tpu.memory_space<vmem>>, %arg2: memref<16x32xbf16, #tpu.memory_space<vmem>>, %arg3: memref<1x32xf32, #tpu.memory_space<vmem>>, %arg4: memref<32x32xbf16, #tpu.memory_space<vmem>>, %arg5: memref<1x32xf32, #tpu.memory_space<vmem>>, %arg6: memref<32x16xbf16, #tpu.memory_space<vmem>>, %arg7: memref<1x16xf32, #tpu.memory_space<vmem>>, %arg8: memref<1x16xf32, #tpu.memory_space<vmem>>, %arg9: memref<1x16xf32, #tpu.memory_space<vmem>>, %arg10: memref<32x16xf32, #tpu.memory_space<vmem>>) attributes {dimension_semantics = [#tpu.dimension_semantics<parallel>], iteration_bounds = array<i64: 2>, scalar_prefetch = 0 : i64, scratch_operands = 0 : i64, tpu.core_type = #tpu.core_type<tc>, window_params = [{transform_indices = @transform_0, window_bounds = array<i64: 32, 16>}, {pipeline_mode = #tpu.pipeline_mode<synchronous>, transform_indices = @transform_1, window_bounds = array<i64: 16, 32>}, {pipeline_mode = #tpu.pipeline_mode<synchronous>, transform_indices = @transform_2, window_bounds = array<i64: 1, 32>}, {pipeline_mode = #tpu.pipeline_mode<synchronous>, transform_indices = @transform_3, window_bounds = array<i64: 32, 32>}, {pipeline_mode = #tpu.pipeline_mode<synchronous>, transform_indices = @transform_4, window_bounds = array<i64: 1, 32>}, {pipeline_mode = #tpu.pipeline_mode<synchronous>, transform_indices = @transform_5, window_bounds = array<i64: 32, 16>}, {pipeline_mode = #tpu.pipeline_mode<synchronous>, transform_indices = @transform_6, window_bounds = array<i64: 1, 16>}, {pipeline_mode = #tpu.pipeline_mode<synchronous>, transform_indices = @transform_7, window_bounds = array<i64: 1, 16>}, {pipeline_mode = #tpu.pipeline_mode<synchronous>, transform_indices = @transform_8, window_bounds = array<i64: 1, 16>}, {transform_indices = @transform_9, window_bounds = array<i64: 32, 16>}]} {
    %c0 = arith.constant 0 : index
    %c0_0 = arith.constant 0 : index
    %0 = vector.load %arg1[%c0, %c0_0] : memref<32x16xf32, #tpu.memory_space<vmem>>, vector<32x16xf32>
    %1 = arith.truncf %0 : vector<32x16xf32> to vector<32x16xbf16>
    %c0_1 = arith.constant 0 : index
    %c0_2 = arith.constant 0 : index
    %2 = vector.load %arg2[%c0_1, %c0_2] : memref<16x32xbf16, #tpu.memory_space<vmem>>, vector<16x32xbf16>
    %cst = arith.constant dense<0.000000e+00> : vector<32x32xf32>
    %3 = tpu.matmul %1, %2, %cst {dimension_numbers = #tpu.dot_dimension_numbers<[1], [0], [0], [1], [0, 0, 1, 1], [], []>} : vector<32x16xbf16>, vector<16x32xbf16>, vector<32x32xf32> -> vector<32x32xf32>
    %c0_3 = arith.constant 0 : index
    %c0_4 = arith.constant 0 : index
    %4 = vector.load %arg3[%c0_3, %c0_4] : memref<1x32xf32, #tpu.memory_space<vmem>>, vector<1x32xf32>
    %5 = vector.broadcast %4 : vector<1x32xf32> to vector<32x32xf32>
    %6 = arith.addf %3, %5 : vector<32x32xf32>
    %cst_5 = arith.constant 0.000000e+00 : f32
    %7 = vector.broadcast %cst_5 : f32 to vector<32x32xf32>
    %8 = arith.maximumf %6, %7 : vector<32x32xf32>
    %9 = arith.truncf %8 : vector<32x32xf32> to vector<32x32xbf16>
    %c0_6 = arith.constant 0 : index
    %c0_7 = arith.constant 0 : index
    %10 = vector.load %arg4[%c0_6, %c0_7] : memref<32x32xbf16, #tpu.memory_space<vmem>>, vector<32x32xbf16>
    %cst_8 = arith.constant dense<0.000000e+00> : vector<32x32xf32>
    %11 = tpu.matmul %9, %10, %cst_8 {dimension_numbers = #tpu.dot_dimension_numbers<[1], [0], [0], [1], [0, 0, 1, 1], [], []>} : vector<32x32xbf16>, vector<32x32xbf16>, vector<32x32xf32> -> vector<32x32xf32>
    %c0_9 = arith.constant 0 : index
    %c0_10 = arith.constant 0 : index
    %12 = vector.load %arg5[%c0_9, %c0_10] : memref<1x32xf32, #tpu.memory_space<vmem>>, vector<1x32xf32>
    %13 = vector.broadcast %12 : vector<1x32xf32> to vector<32x32xf32>
    %14 = arith.addf %11, %13 : vector<32x32xf32>
    %cst_11 = arith.constant 0.000000e+00 : f32
    %15 = vector.broadcast %cst_11 : f32 to vector<32x32xf32>
    %16 = arith.maximumf %14, %15 : vector<32x32xf32>
    %17 = arith.truncf %16 : vector<32x32xf32> to vector<32x32xbf16>
    %c0_12 = arith.constant 0 : index
    %c0_13 = arith.constant 0 : index
    %18 = vector.load %arg6[%c0_12, %c0_13] : memref<32x16xbf16, #tpu.memory_space<vmem>>, vector<32x16xbf16>
    %cst_14 = arith.constant dense<0.000000e+00> : vector<32x16xf32>
    %19 = tpu.matmul %17, %18, %cst_14 {dimension_numbers = #tpu.dot_dimension_numbers<[1], [0], [0], [1], [0, 0, 1, 1], [], []>} : vector<32x32xbf16>, vector<32x16xbf16>, vector<32x16xf32> -> vector<32x16xf32>
    %c0_15 = arith.constant 0 : index
    %c0_16 = arith.constant 0 : index
    %20 = vector.load %arg7[%c0_15, %c0_16] : memref<1x16xf32, #tpu.memory_space<vmem>>, vector<1x16xf32>
    %21 = vector.broadcast %20 : vector<1x16xf32> to vector<32x16xf32>
    %22 = arith.addf %19, %21 : vector<32x16xf32>
    %c0_17 = arith.constant 0 : index
    %c0_18 = arith.constant 0 : index
    %23 = vector.load %arg8[%c0_17, %c0_18] : memref<1x16xf32, #tpu.memory_space<vmem>>, vector<1x16xf32>
    %24 = vector.broadcast %23 : vector<1x16xf32> to vector<32x16xf32>
    %25 = arith.maximumf %22, %24 : vector<32x16xf32>
    %c0_19 = arith.constant 0 : index
    %c0_20 = arith.constant 0 : index
    %26 = vector.load %arg9[%c0_19, %c0_20] : memref<1x16xf32, #tpu.memory_space<vmem>>, vector<1x16xf32>
    %27 = vector.broadcast %26 : vector<1x16xf32> to vector<32x16xf32>
    %28 = arith.minimumf %25, %27 : vector<32x16xf32>
    %c0_21 = arith.constant 0 : index
    %c0_22 = arith.constant 0 : index
    %29 = vector.load %arg10[%c0_21, %c0_22] : memref<32x16xf32, #tpu.memory_space<vmem>>, vector<32x16xf32>
    tpu.vector_store %arg10[%c0_21, %c0_22], %28 {strides = array<i32>} : memref<32x16xf32, #tpu.memory_space<vmem>>, vector<32x16xf32>,
    return
  }
  func.func @transform_0(%arg0: i32) -> (i32, i32) {
    %c0_i32 = arith.constant 0 : i32
    %c0_i32_0 = arith.constant 0 : i32
    return %arg0, %c0_i32 : i32, i32
  }
  func.func @transform_1(%arg0: i32) -> (i32, i32) {
    %c0_i32 = arith.constant 0 : i32
    %c0_i32_0 = arith.constant 0 : i32
    %c0_i32_1 = arith.constant 0 : i32
    return %c0_i32, %c0_i32_0 : i32, i32
  }
  func.func @transform_2(%arg0: i32) -> (i32, i32) {
    %c0_i32 = arith.constant 0 : i32
    %c0_i32_0 = arith.constant 0 : i32
    %c0_i32_1 = arith.constant 0 : i32
    return %c0_i32, %c0_i32_0 : i32, i32
  }
  func.func @transform_3(%arg0: i32) -> (i32, i32) {
    %c0_i32 = arith.constant 0 : i32
    %c0_i32_0 = arith.constant 0 : i32
    %c0_i32_1 = arith.constant 0 : i32
    return %c0_i32, %c0_i32_0 : i32, i32
  }
  func.func @transform_4(%arg0: i32) -> (i32, i32) {
    %c0_i32 = arith.constant 0 : i32
    %c0_i32_0 = arith.constant 0 : i32
    %c0_i32_1 = arith.constant 0 : i32
    return %c0_i32, %c0_i32_0 : i32, i32
  }
  func.func @transform_5(%arg0: i32) -> (i32, i32) {
    %c0_i32 = arith.constant 0 : i32
    %c0_i32_0 = arith.constant 0 : i32
    %c0_i32_1 = arith.constant 0 : i32
    return %c0_i32, %c0_i32_0 : i32, i32
  }
  func.func @transform_6(%arg0: i32) -> (i32, i32) {
    %c0_i32 = arith.constant 0 : i32
    %c0_i32_0 = arith.constant 0 : i32
    %c0_i32_1 = arith.constant 0 : i32
    return %c0_i32, %c0_i32_0 : i32, i32
  }
  func.func @transform_7(%arg0: i32) -> (i32, i32) {
    %c0_i32 = arith.constant 0 : i32
    %c0_i32_0 = arith.constant 0 : i32
    %c0_i32_1 = arith.constant 0 : i32
    return %c0_i32, %c0_i32_0 : i32, i32
  }
  func.func @transform_8(%arg0: i32) -> (i32, i32) {
    %c0_i32 = arith.constant 0 : i32
    %c0_i32_0 = arith.constant 0 : i32
    %c0_i32_1 = arith.constant 0 : i32
    return %c0_i32, %c0_i32_0 : i32, i32
  }
  func.func @transform_9(%arg0: i32) -> (i32, i32) {
    %c0_i32 = arith.constant 0 : i32
    %c0_i32_0 = arith.constant 0 : i32
    return %arg0, %c0_i32 : i32, i32
  }
}

</mosaic_0001>

<llo_original>
// kernel: policy_network_forward.1
$region0: #{policy_network_forward.1}
  #allocation0 [shape = 'u32[]', space=smem, size = 0x4, offset = 0x4, fixed_abs, tag = 'smem constant byte address 0x4 - core index']
  #allocation1 [shape = 'u32[72,128]{1,0:T(1,128)}', space=vmem, size = 0x9000, scoped, tag = 'internal scratch']
  %s0 = inlined_call_operand.vmem [shape: f32[64,16], index: 0, kind: input, shape index: {}]
  %s1 = inlined_call_operand.vmem [shape: bf16[16,32], index: 1, kind: input, shape index: {}]
  %s2 = inlined_call_operand.vmem [shape: f32[1,32], index: 2, kind: input, shape index: {}]
  %s3 = inlined_call_operand.vmem [shape: bf16[32,32], index: 3, kind: input, shape index: {}]
  %s4 = inlined_call_operand.vmem [shape: f32[1,32], index: 4, kind: input, shape index: {}]
  %s5 = inlined_call_operand.vmem [shape: bf16[32,16], index: 5, kind: input, shape index: {}]
  %s6 = inlined_call_operand.vmem [shape: f32[1,16], index: 6, kind: input, shape index: {}]
  %s7 = inlined_call_operand.vmem [shape: f32[1,16], index: 7, kind: input, shape index: {}]
  %s8 = inlined_call_operand.vmem [shape: f32[1,16], index: 8, kind: input, shape index: {}]
  %s9 = inlined_call_operand.vmem [shape: f32[64,16], index: 9, kind: output, shape index: {}]
  %s10 = sld [smem:[#allocation0]]
  $region69: #{policy_network_forward.1} parent=0
    _
  %s12 = ssub.s32 1, %s10
  %s13 = scalar_select 0, %s12, %s10
  loop: start=0, step=1, limit=4
  $region2: #{policy_network_forward.1} parent=0 // loop_pre_header
    _
  $region3: #{policy_network_forward.1} parent=0 // loop_header
    %s15 = sphi 0, %s19
    %p16 = scmp.ge.s32.totalorder %s15, 4
    %s25 = sphi 0, %s27
    %s28 = sphi 0, %s25
    %s29 = sphi 0, %s28
    %s45 = sphi 0, %s29
    %s49 = sphi 0, %s49
    %s51 = sphi 0, %s49
    %s52 = sphi 0, %s51
    %s66 = sphi 0, %s52
    %s70 = sphi 0, %s70
    %s72 = sphi 0, %s70
    %s73 = sphi 0, %s72
    %s87 = sphi 0, %s73
    %s91 = sphi 0, %s91
    %s93 = sphi 0, %s91
    %s94 = sphi 0, %s93
    %s108 = sphi 0, %s94
    %s112 = sphi 0, %s112
    %s114 = sphi 0, %s112
    %s115 = sphi 0, %s114
    %s129 = sphi 0, %s115
    %s133 = sphi 0, %s133
    %s135 = sphi 0, %s133
    %s136 = sphi 0, %s135
    %s150 = sphi 0, %s136
    %s154 = sphi 0, %s154
    %s156 = sphi 0, %s154
    %s157 = sphi 0, %s156
    %s171 = sphi 0, %s157
    %s175 = sphi 0, %s175
    %s177 = sphi 0, %s175
    %s178 = sphi 0, %s177
    %s192 = sphi 0, %s178
    %s196 = sphi 0, %s196
    %s198 = sphi 0, %s196
    %s199 = sphi 0, %s198
    %s213 = sphi 0, %s199
    %s219 = sphi 0, %s221
    %s222 = sphi 0, %s219
    %s223 = sphi 0, %s222
    %s239 = sphi 0, %s223
  $region4: #{policy_network_forward.1} parent=0 // loop_header_branch
    %18 = sbr.rel (%p16) target = $region8
  $region5: #{policy_network_forward.1} parent=0 // loop_body
    %s20 = ssub.s32 %s15, 1
    %s21 = ssub.s32 %s15, 2
    %s22 = sadd.s32 %s15, 1
    %s23 = ssub.s32 %s15, %s22
    %p24 = scmp.eq.s32.totalorder %s23, 0
    %s26 = sadd.s32 %s25, 1
    %s27 = scalar_select %p24, %s25, %s26
    %p30 = pneg %p24
    %p31 = scmp.eq.s32.totalorder %s15, 1
    %p32 = por %p30, %p31
    %p33 = scmp.ne.s32.totalorder %s25, %s28
    %p34 = scmp.eq.s32.totalorder %s15, 0
    %p35 = por %p33, %p34
    %p36 = scmp.ne.s32.totalorder %s25, %s28
    %p37 = scmp.eq.s32.totalorder %s20, 1
    %p38 = por %p36, %p37
    %p39 = scmp.ne.s32.totalorder %s28, %s29
    %p40 = scmp.eq.s32.totalorder %s20, 0
    %p41 = por %p39, %p40
    %p42 = scmp.ne.s32.totalorder %s28, %s29
    %p43 = scmp.eq.s32.totalorder %s21, 1
    %p44 = por %p42, %p43
    %p46 = scmp.ne.s32.totalorder %s29, %s45
    %p47 = scmp.eq.s32.totalorder %s21, 0
    %p48 = por %p46, %p47
    %s50 = sadd.s32 %s49, 1
    %p53 = scmp.eq.s32.totalorder %s15, 1
    %p54 = scmp.ne.s32.totalorder %s49, %s51
    %p55 = scmp.eq.s32.totalorder %s15, 0
    %p56 = por %p54, %p55
    %p57 = scmp.ne.s32.totalorder %s49, %s51
    %p58 = scmp.eq.s32.totalorder %s20, 1
    %p59 = por %p57, %p58
    %p60 = scmp.ne.s32.totalorder %s51, %s52
    %p61 = scmp.eq.s32.totalorder %s20, 0
    %p62 = por %p60, %p61
    %p63 = scmp.ne.s32.totalorder %s51, %s52
    %p64 = scmp.eq.s32.totalorder %s21, 1
    %p65 = por %p63, %p64
    %p67 = scmp.ne.s32.totalorder %s52, %s66
    %p68 = scmp.eq.s32.totalorder %s21, 0
    %p69 = por %p67, %p68
    %s71 = sadd.s32 %s70, 1
    %p74 = scmp.eq.s32.totalorder %s15, 1
    %p75 = scmp.ne.s32.totalorder %s70, %s72
    %p76 = scmp.eq.s32.totalorder %s15, 0
    %p77 = por %p75, %p76
    %p78 = scmp.ne.s32.totalorder %s70, %s72
    %p79 = scmp.eq.s32.totalorder %s20, 1
    %p80 = por %p78, %p79
    %p81 = scmp.ne.s32.totalorder %s72, %s73
    %p82 = scmp.eq.s32.totalorder %s20, 0
    %p83 = por %p81, %p82
    %p84 = scmp.ne.s32.totalorder %s72, %s73
    %p85 = scmp.eq.s32.totalorder %s21, 1
    %p86 = por %p84, %p85
    %p88 = scmp.ne.s32.totalorder %s73, %s87
    %p89 = scmp.eq.s32.totalorder %s21, 0
    %p90 = por %p88, %p89
    %s92 = sadd.s32 %s91, 1
    %p95 = scmp.eq.s32.totalorder %s15, 1
    %p96 = scmp.ne.s32.totalorder %s91, %s93
    %p97 = scmp.eq.s32.totalorder %s15, 0
    %p98 = por %p96, %p97
    %p99 = scmp.ne.s32.totalorder %s91, %s93
    %p100 = scmp.eq.s32.totalorder %s20, 1
    %p101 = por %p99, %p100
    %p102 = scmp.ne.s32.totalorder %s93, %s94
    %p103 = scmp.eq.s32.totalorder %s20, 0
    %p104 = por %p102, %p103
    %p105 = scmp.ne.s32.totalorder %s93, %s94
    %p106 = scmp.eq.s32.totalorder %s21, 1
    %p107 = por %p105, %p106
    %p109 = scmp.ne.s32.totalorder %s94, %s108
    %p110 = scmp.eq.s32.totalorder %s21, 0
    %p111 = por %p109, %p110
    %s113 = sadd.s32 %s112, 1
    %p116 = scmp.eq.s32.totalorder %s15, 1
    %p117 = scmp.ne.s32.totalorder %s112, %s114
    %p118 = scmp.eq.s32.totalorder %s15, 0
    %p119 = por %p117, %p118
    %p120 = scmp.ne.s32.totalorder %s112, %s114
    %p121 = scmp.eq.s32.totalorder %s20, 1
    %p122 = por %p120, %p121
    %p123 = scmp.ne.s32.totalorder %s114, %s115
    %p124 = scmp.eq.s32.totalorder %s20, 0
    %p125 = por %p123, %p124
    %p126 = scmp.ne.s32.totalorder %s114, %s115
    %p127 = scmp.eq.s32.totalorder %s21, 1
    %p128 = por %p126, %p127
    %p130 = scmp.ne.s32.totalorder %s115, %s129
    %p131 = scmp.eq.s32.totalorder %s21, 0
    %p132 = por %p130, %p131
    %s134 = sadd.s32 %s133, 1
    %p137 = scmp.eq.s32.totalorder %s15, 1
    %p138 = scmp.ne.s32.totalorder %s133, %s135
    %p139 = scmp.eq.s32.totalorder %s15, 0
    %p140 = por %p138, %p139
    %p141 = scmp.ne.s32.totalorder %s133, %s135
    %p142 = scmp.eq.s32.totalorder %s20, 1
    %p143 = por %p141, %p142
    %p144 = scmp.ne.s32.totalorder %s135, %s136
    %p145 = scmp.eq.s32.totalorder %s20, 0
    %p146 = por %p144, %p145
    %p147 = scmp.ne.s32.totalorder %s135, %s136
    %p148 = scmp.eq.s32.totalorder %s21, 1
    %p149 = por %p147, %p148
    %p151 = scmp.ne.s32.totalorder %s136, %s150
    %p152 = scmp.eq.s32.totalorder %s21, 0
    %p153 = por %p151, %p152
    %s155 = sadd.s32 %s154, 1
    %p158 = scmp.eq.s32.totalorder %s15, 1
    %p159 = scmp.ne.s32.totalorder %s154, %s156
    %p160 = scmp.eq.s32.totalorder %s15, 0
    %p161 = por %p159, %p160
    %p162 = scmp.ne.s32.totalorder %s154, %s156
    %p163 = scmp.eq.s32.totalorder %s20, 1
    %p164 = por %p162, %p163
    %p165 = scmp.ne.s32.totalorder %s156, %s157
    %p166 = scmp.eq.s32.totalorder %s20, 0
    %p167 = por %p165, %p166
    %p168 = scmp.ne.s32.totalorder %s156, %s157
    %p169 = scmp.eq.s32.totalorder %s21, 1
    %p170 = por %p168, %p169
    %p172 = scmp.ne.s32.totalorder %s157, %s171
    %p173 = scmp.eq.s32.totalorder %s21, 0
    %p174 = por %p172, %p173
    %s176 = sadd.s32 %s175, 1
    %p179 = scmp.eq.s32.totalorder %s15, 1
    %p180 = scmp.ne.s32.totalorder %s175, %s177
    %p181 = scmp.eq.s32.totalorder %s15, 0
    %p182 = por %p180, %p181
    %p183 = scmp.ne.s32.totalorder %s175, %s177
    %p184 = scmp.eq.s32.totalorder %s20, 1
    %p185 = por %p183, %p184
    %p186 = scmp.ne.s32.totalorder %s177, %s178
    %p187 = scmp.eq.s32.totalorder %s20, 0
    %p188 = por %p186, %p187
    %p189 = scmp.ne.s32.totalorder %s177, %s178
    %p190 = scmp.eq.s32.totalorder %s21, 1
    %p191 = por %p189, %p190
    %p193 = scmp.ne.s32.totalorder %s178, %s192
    %p194 = scmp.eq.s32.totalorder %s21, 0
    %p195 = por %p193, %p194
    %s197 = sadd.s32 %s196, 1
    %p200 = scmp.eq.s32.totalorder %s15, 1
    %p201 = scmp.ne.s32.totalorder %s196, %s198
    %p202 = scmp.eq.s32.totalorder %s15, 0
    %p203 = por %p201, %p202
    %p204 = scmp.ne.s32.totalorder %s196, %s198
    %p205 = scmp.eq.s32.totalorder %s20, 1
    %p206 = por %p204, %p205
    %p207 = scmp.ne.s32.totalorder %s198, %s199
    %p208 = scmp.eq.s32.totalorder %s20, 0
    %p209 = por %p207, %p208
    %p210 = scmp.ne.s32.totalorder %s198, %s199
    %p211 = scmp.eq.s32.totalorder %s21, 1
    %p212 = por %p210, %p211
    %p214 = scmp.ne.s32.totalorder %s199, %s213
    %p215 = scmp.eq.s32.totalorder %s21, 0
    %p216 = por %p214, %p215
    %s217 = ssub.s32 %s15, %s22
    %p218 = scmp.eq.s32.totalorder %s217, 0
    %s220 = sadd.s32 %s219, 1
    %s221 = scalar_select %p218, %s219, %s220
    %p224 = pneg %p218
    %p225 = scmp.eq.s32.totalorder %s15, 1
    %p226 = por %p224, %p225
    %p227 = scmp.ne.s32.totalorder %s219, %s222
    %p228 = scmp.eq.s32.totalorder %s15, 0
    %p229 = por %p227, %p228
    %p230 = scmp.ne.s32.totalorder %s219, %s222
    %p231 = scmp.eq.s32.totalorder %s20, 1
    %p232 = por %p230, %p231
    %p233 = scmp.ne.s32.totalorder %s222, %s223
    %p234 = scmp.eq.s32.totalorder %s20, 0
    %p235 = por %p233, %p234
    %p236 = scmp.ne.s32.totalorder %s222, %s223
    %p237 = scmp.eq.s32.totalorder %s21, 1
    %p238 = por %p236, %p237
    %p240 = scmp.ne.s32.totalorder %s223, %s239
    %p241 = scmp.eq.s32.totalorder %s21, 0
    %p242 = por %p240, %p241
    %p243 = scmp.le.s32.totalorder 1, %s15
    %p244 = scmp.lt.s32.totalorder %s15, 3
    %p245 = pnand %p243, %p244
    %p246 = pneg %p245
    // Predicated region
    $region9: #{policy_network_forward.1} parent=5 // pred_check
      _
    $region10: #{policy_network_forward.1} parent=5 // pred_check_branch
      %248 = sbr.rel (%p245) target = $region12
    $region11: #{policy_network_forward.1} parent=5 // pred_region
      %s249 = ssub.s32 %s15, 1
      // Predicated region
      $region13: #{policy_network_forward.1} parent=11 // pred_check
        %p250 = pneg %p62
      $region14: #{policy_network_forward.1} parent=11 // pred_check_branch
        %252 = sbr.rel (%p250) target = $region16
      $region15: #{policy_network_forward.1} parent=11 // pred_region
        _
      $region16: #{policy_network_forward.1} parent=11 // pred_fallthru
        _
      // Predicated region
      $region17: #{policy_network_forward.1} parent=11 // pred_check
        %p253 = pneg %p83
      $region18: #{policy_network_forward.1} parent=11 // pred_check_branch
        %255 = sbr.rel (%p253) target = $region20
      $region19: #{policy_network_forward.1} parent=11 // pred_region
        _
      $region20: #{policy_network_forward.1} parent=11 // pred_fallthru
        _
      // Predicated region
      $region21: #{policy_network_forward.1} parent=11 // pred_check
        %p256 = pneg %p104
      $region22: #{policy_network_forward.1} parent=11 // pred_check_branch
        %258 = sbr.rel (%p256) target = $region24
      $region23: #{policy_network_forward.1} parent=11 // pred_region
        _
      $region24: #{policy_network_forward.1} parent=11 // pred_fallthru
        _
      // Predicated region
      $region25: #{policy_network_forward.1} parent=11 // pred_check
        %p259 = pneg %p125
      $region26: #{policy_network_forward.1} parent=11 // pred_check_branch
        %261 = sbr.rel (%p259) target = $region28
      $region27: #{policy_network_forward.1} parent=11 // pred_region
        _
      $region28: #{policy_network_forward.1} parent=11 // pred_fallthru
        _
      // Predicated region
      $region29: #{policy_network_forward.1} parent=11 // pred_check
        %p262 = pneg %p146
      $region30: #{policy_network_forward.1} parent=11 // pred_check_branch
        %264 = sbr.rel (%p262) target = $region32
      $region31: #{policy_network_forward.1} parent=11 // pred_region
        _
      $region32: #{policy_network_forward.1} parent=11 // pred_fallthru
        _
      // Predicated region
      $region33: #{policy_network_forward.1} parent=11 // pred_check
        %p265 = pneg %p167
      $region34: #{policy_network_forward.1} parent=11 // pred_check_branch
        %267 = sbr.rel (%p265) target = $region36
      $region35: #{policy_network_forward.1} parent=11 // pred_region
        _
      $region36: #{policy_network_forward.1} parent=11 // pred_fallthru
        _
      // Predicated region
      $region37: #{policy_network_forward.1} parent=11 // pred_check
        %p268 = pneg %p188
      $region38: #{policy_network_forward.1} parent=11 // pred_check_branch
        %270 = sbr.rel (%p268) target = $region40
      $region39: #{policy_network_forward.1} parent=11 // pred_region
        _
      $region40: #{policy_network_forward.1} parent=11 // pred_fallthru
        _
      // Predicated region
      $region41: #{policy_network_forward.1} parent=11 // pred_check
        %p271 = pneg %p209
      $region42: #{policy_network_forward.1} parent=11 // pred_check_branch
        %273 = sbr.rel (%p271) target = $region44
      $region43: #{policy_network_forward.1} parent=11 // pred_region
        _
      $region44: #{policy_network_forward.1} parent=11 // pred_fallthru
        _
    $region12: #{policy_network_forward.1} parent=5 // pred_fallthru
      _
    %p274 = scmp.lt.s32.totalorder %s15, 2
    // Predicated region
    $region45: #{policy_network_forward.1} parent=5 // pred_check
      %p275 = pneg %p274
    $region46: #{policy_network_forward.1} parent=5 // pred_check_branch
      %277 = sbr.rel (%p275) target = $region48
    $region47: #{policy_network_forward.1} parent=5 // pred_region
      // Predicated region
      $region49: #{policy_network_forward.1} parent=47 // pred_check
        %p278 = pneg %p35
      $region50: #{policy_network_forward.1} parent=47 // pred_check_branch
        %280 = sbr.rel (%p278) target = $region52
      $region51: #{policy_network_forward.1} parent=47 // pred_region
        %s281 = smul.u32 4, %s15
        %p282 = scmp.lt.s32.totalorder %s281, 7
        %s283 = scalar_select %p282, %s281, 7
        %s284 = smul.addr %s283, 8
        %s285 = scalar_lea.vmem %s0, %s284
        %s286 = smul.u32 4, %s15
      $region52: #{policy_network_forward.1} parent=47 // pred_fallthru
        _
    $region48: #{policy_network_forward.1} parent=5 // pred_fallthru
      _
    %p287 = scmp.le.s32.totalorder 1, %s15
    %p288 = scmp.lt.s32.totalorder %s15, 3
    %p289 = pnand %p287, %p288
    %p290 = pneg %p289
    // Predicated region
    $region53: #{policy_network_forward.1} parent=5 // pred_check
      _
    $region54: #{policy_network_forward.1} parent=5 // pred_check_branch
      %292 = sbr.rel (%p289) target = $region56
    $region55: #{policy_network_forward.1} parent=5 // pred_region
      %s293 = ssub.s32 %s15, 1
      %s294 = smul.u32 4, %s20
      %p295 = scmp.lt.s32.totalorder %s294, 7
      %s296 = scalar_select %p295, %s294, 7
      %s297 = smul.addr %s296, 8
      %s298 = scalar_lea.vmem %s0, %s297
      %p299 = pneg %p41
      %p300 = pneg %p38
      %p301 = pneg %p62
      %p302 = pneg %p59
      %p303 = pneg %p83
      %p304 = pneg %p80
      %p305 = pneg %p104
      %p306 = pneg %p101
      %p307 = pneg %p125
      %p308 = pneg %p122
      %p309 = pneg %p146
      %p310 = pneg %p143
      %p311 = pneg %p167
      %p312 = pneg %p164
      %p313 = pneg %p188
      %p314 = pneg %p185
      %p315 = pneg %p209
      %p316 = pneg %p206
      %p317 = pneg %p235
      %p318 = pneg %p232
      %s319 = smul.u32 4, %s20
      %p320 = scmp.lt.s32.totalorder %s319, 7
      %s321 = scalar_select %p320, %s319, 7
      %s322 = smul.addr %s321, 8
      %s323 = scalar_lea.vmem %s9, %s322
      %s324 = smul.u32 4, %s20
      %p325 = scmp.lt.s32.totalorder %s324, 7
      %s326 = scalar_select %p325, %s324, 7
      %s327 = smul.addr %s326, 8
      %s328 = scalar_lea.vmem %s0, %s327
      %s329 = smul.u32 4, %s20
      %s330 = smul.u32 4, %s20
      %p331 = scmp.lt.s32.totalorder %s330, 7
      %s332 = scalar_select %p331, %s330, 7
      %s333 = smul.addr %s332, 8
      %s334 = scalar_lea.vmem %s9, %s333
      %s335 = smul.u32 4, %s20
      %v337 = vld [vmem:[%s328] sm:$0xff]
      %v338 = vld [vmem:[%s328 + $0x8] sm:$0xff]
      %v339 = vld [vmem:[%s328 + $0x10] sm:$0xff]
      %v340 = vld [vmem:[%s328 + $0x18] sm:$0xff]
      %v341 = vpack.c.bf16 %v338, %v337
      %v342 = vpack.c.bf16 %v340, %v339
      %v343 = vld [vmem:[%s1] sm:$0xf]
      %v344 = vld [vmem:[%s1 + $0x4] sm:$0xf]
      %v345 = vld [vmem:[%s2] sm:$0x1]
      %v347 = vperm.slane %v345, 0
      %v351 = vunpack.c.l.b16 %v343
      %v352 = vunpack.c.l.b16 %v344
      %v353 = vpack.c.b16 %v352, %v351
      %vm355 = vcmask 130048
      %v357 = vsel %vm355, %v341, 0
      %v360 = vsel %vm355, %v342, 0
      %362 = vmatpush.bf16.msra.mxu0 0
      %363 = vmatpush.bf16.msra.mxu0 0
      %364 = vmatpush.bf16.msra.mxu0 0
      %365 = vmatpush.bf16.msra.mxu0 0
      %366 = vmatpush.bf16.msra.mxu0 0
      %367 = vmatpush.bf16.msra.mxu0 0
      %368 = vmatpush.bf16.msra.mxu0 0
      %369 = vmatpush.bf16.msra.mxu0 %v353
      %370 = vmatmul.bf16.gmra.mxu0 %v357
      %v371 = vpop.f32.mrf.mxu0
      %v372 = vadd.f32 %v347, %v371
      %v373 = vpop.f32.mrf.mxu0
      %v374 = vadd.f32 %v347, %v373
      %375 = vmatmul.bf16.gmra.mxu0 %v360
      %v376 = vpop.f32.mrf.mxu0
      %v377 = vadd.f32 %v347, %v376
      %v378 = vpop.f32.mrf.mxu0
      %v379 = vadd.f32 %v347, %v378
      %380 = vdwg.mxu0
      %v381 = vmax.f32 %v372, 0.0
      %v382 = vmax.f32 %v374, 0.0
      %v383 = vmax.f32 %v377, 0.0
      %v384 = vmax.f32 %v379, 0.0
      %v385 = vpack.c.bf16 %v382, %v381
      %v386 = vpack.c.bf16 %v384, %v383
      %v387 = vld [vmem:[%s3] sm:$0xf]
      %v388 = vld [vmem:[%s3 + $0x4] sm:$0xf]
      %v389 = vld [vmem:[%s3 + $0x8] sm:$0xf]
      %v390 = vld [vmem:[%s3 + $0xc] sm:$0xf]
      %v391 = vld [vmem:[%s4] sm:$0x1]
      %v393 = vperm.slane %v391, 0
      %v399 = vunpack.c.l.b16 %v387
      %v400 = vunpack.c.l.b16 %v388
      %v401 = vunpack.c.l.b16 %v389
      %v402 = vunpack.c.l.b16 %v390
      %v403 = vpack.c.b16 %v400, %v399
      %v404 = vpack.c.b16 %v402, %v401
      %vm407 = vcmask 261120
      %v409 = vsel %vm407, %v385, 0
      %v412 = vsel %vm407, %v386, 0
      %414 = vmatpush.bf16.msra.mxu0 0
      %415 = vmatpush.bf16.msra.mxu0 0
      %416 = vmatpush.bf16.msra.mxu0 0
      %417 = vmatpush.bf16.msra.mxu0 0
      %418 = vmatpush.bf16.msra.mxu0 0
      %419 = vmatpush.bf16.msra.mxu0 0
      %420 = vmatpush.bf16.msra.mxu0 %v404
      %421 = vmatpush.bf16.msra.mxu0 %v403
      %422 = vmatmul.bf16.gmra.mxu0 %v409
      %v423 = vpop.f32.mrf.mxu0
      %v424 = vadd.f32 %v393, %v423
      %v425 = vpop.f32.mrf.mxu0
      %v426 = vadd.f32 %v393, %v425
      %427 = vmatmul.bf16.gmra.mxu0 %v412
      %v428 = vpop.f32.mrf.mxu0
      %v429 = vadd.f32 %v393, %v428
      %v430 = vpop.f32.mrf.mxu0
      %v431 = vadd.f32 %v393, %v430
      %432 = vdwg.mxu0
      %v433 = vmax.f32 %v424, 0.0
      %v434 = vmax.f32 %v426, 0.0
      %v435 = vmax.f32 %v429, 0.0
      %v436 = vmax.f32 %v431, 0.0
      %v437 = vpack.c.bf16 %v434, %v433
      %v438 = vpack.c.bf16 %v436, %v435
      %v439 = vld [vmem:[%s5] sm:$0xf]
      %v440 = vld [vmem:[%s5 + $0x4] sm:$0xf]
      %v441 = vld [vmem:[%s5 + $0x8] sm:$0xf]
      %v442 = vld [vmem:[%s5 + $0xc] sm:$0xf]
      %v443 = vld [vmem:[%s6] sm:$0x1]
      %v445 = vperm.slane %v443, 0
      %v451 = vunpack.c.l.b16 %v439
      %v452 = vunpack.c.l.b16 %v440
      %v453 = vunpack.c.l.b16 %v441
      %v454 = vunpack.c.l.b16 %v442
      %v455 = vpack.c.b16 %v452, %v451
      %v456 = vpack.c.b16 %v454, %v453
      %v460 = vsel %vm407, %v437, 0
      %v463 = vsel %vm407, %v438, 0
      %465 = vmatpush.bf16.msra.mxu0 0
      %466 = vmatpush.bf16.msra.mxu0 0
      %467 = vmatpush.bf16.msra.mxu0 0
      %468 = vmatpush.bf16.msra.mxu0 0
      %469 = vmatpush.bf16.msra.mxu0 0
      %470 = vmatpush.bf16.msra.mxu0 0
      %471 = vmatpush.bf16.msra.mxu0 %v456
      %472 = vmatpush.bf16.msra.mxu0 %v455
      %473 = vmatmul.bf16.gmra.mxu0 %v460
      %v474 = vpop.f32.mrf.mxu0
      %v475 = vadd.f32 %v445, %v474
      %v476 = vpop.f32.mrf.mxu0
      %v477 = vadd.f32 %v445, %v476
      %478 = vmatmul.bf16.gmra.mxu0 %v463
      %v479 = vpop.f32.mrf.mxu0
      %v480 = vadd.f32 %v445, %v479
      %v481 = vpop.f32.mrf.mxu0
      %v482 = vadd.f32 %v445, %v481
      %483 = vdwg.mxu0
      %v484 = vld [vmem:[%s7] sm:$0x1]
      %v486 = vperm.slane %v484, 0
      %v488 = vmax.f32 %v475, %v486
      %v489 = vmax.f32 %v477, %v486
      %v490 = vmax.f32 %v480, %v486
      %v491 = vmax.f32 %v482, %v486
      %v492 = vld [vmem:[%s8] sm:$0x1]
      %v494 = vperm.slane %v492, 0
      %v496 = vmin.f32 %v488, %v494
      %v497 = vmin.f32 %v489, %v494
      %v498 = vmin.f32 %v490, %v494
      %v499 = vmin.f32 %v491, %v494
      %500 = vst.msk [vmem:[%s334] sm:$0xff] %vm355, %v496
      %501 = vst.msk [vmem:[%s334 + $0x8] sm:$0xff] %vm355, %v497
      %502 = vst.msk [vmem:[%s334 + $0x10] sm:$0xff] %vm355, %v498
      %503 = vst.msk [vmem:[%s334 + $0x18] sm:$0xff] %vm355, %v499
      %s504 = smul.u32 4, %s20
      %p505 = scmp.lt.s32.totalorder %s504, 7
      %s506 = scalar_select %p505, %s504, 7
      %s507 = smul.addr %s506, 8
      %s508 = scalar_lea.vmem %s9, %s507
      // Predicated region
      $region57: #{policy_network_forward.1} parent=55 // pred_check
        %p509 = pneg %p232
      $region58: #{policy_network_forward.1} parent=55 // pred_check_branch
        %511 = sbr.rel (%p509) target = $region60
      $region59: #{policy_network_forward.1} parent=55 // pred_region
        %s512 = smul.u32 4, %s20
      $region60: #{policy_network_forward.1} parent=55 // pred_fallthru
        _
    $region56: #{policy_network_forward.1} parent=5 // pred_fallthru
      _
    %p513 = scmp.le.s32.totalorder 2, %s15
    // Predicated region
    $region61: #{policy_network_forward.1} parent=5 // pred_check
      %p514 = pneg %p513
    $region62: #{policy_network_forward.1} parent=5 // pred_check_branch
      %516 = sbr.rel (%p514) target = $region64
    $region63: #{policy_network_forward.1} parent=5 // pred_region
      %s517 = ssub.s32 %s15, 2
      // Predicated region
      $region65: #{policy_network_forward.1} parent=63 // pred_check
        %p518 = pneg %p238
      $region66: #{policy_network_forward.1} parent=63 // pred_check_branch
        %520 = sbr.rel (%p518) target = $region68
      $region67: #{policy_network_forward.1} parent=63 // pred_region
        %s521 = smul.u32 4, %s21
        %p522 = scmp.lt.s32.totalorder %s521, 7
        %s523 = scalar_select %p522, %s521, 7
        %s524 = smul.addr %s523, 8
        %s525 = scalar_lea.vmem %s9, %s524
      $region68: #{policy_network_forward.1} parent=63 // pred_fallthru
        _
    $region64: #{policy_network_forward.1} parent=5 // pred_fallthru
      _
  $region6: #{policy_network_forward.1} parent=0 // loop_footer
    %s19 = sadd.s32 1, %s15
  $region7: #{policy_network_forward.1} parent=0 // loop_footer_branch
    %14 = sbr.rel target = $region3
  $region8: #{policy_network_forward.1} parent=0 // loop_exit
    _

</llo_original>
